<compile_context>
chip_gen: v7x
topology: tpu7x:2x2x1
jax: 0.10.0
libtpu: 0.0.40
codegen_flags: <defaults>
</compile_context>

<pallas_src>
import math

import jax
import jax.numpy as jnp
from jax.experimental import pallas as pl
from jax.experimental.pallas import tpu as pltpu

EPS = float(jnp.finfo(jnp.float32).eps)
INV_2PI = 1.0 / (2.0 * math.pi)


def _loss_kernel(tgt_ref, eos_ref, pi_ref, mu1_ref, mu2_ref,
                 s1_ref, s2_ref, rho_ref, out_ref):
    tgt = tgt_ref[...]          # (tn, 3)
    x1 = tgt[:, 0:1]            # (tn, 1)
    x2 = tgt[:, 1:2]            # (tn, 1)
    x_eos = tgt[:, 2:3]         # (tn, 1)
    eos = eos_ref[...]          # (tn, 1)

    pi = pi_ref[...]            # (tn, M)
    mu1 = mu1_ref[...]
    mu2 = mu2_ref[...]
    s1 = s1_ref[...]
    s2 = s2_ref[...]
    rho = rho_ref[...]

    # gaussian_2d, restructured around reciprocals (EUP) instead of divides (VPU)
    inv_s1 = pl.reciprocal(s1, approx=True)
    inv_s2 = pl.reciprocal(s2, approx=True)
    n1s = (x1 - mu1) * inv_s1                       # (tn, M) via lane-broadcast
    n2s = (x2 - mu2) * inv_s2
    z = n1s * n1s + n2s * n2s - 2.0 * rho * n1s * n2s
    omr = 1.0 - rho * rho
    # keep the exponent scale as an exact divide (precision-sensitive as |rho|->1)
    expo = -0.5 * z / omr
    gaussian = jnp.exp(expo) * (INV_2PI * inv_s1 * inv_s2) * jax.lax.rsqrt(omr)

    # mixture NLL (lane reduce over M) + Bernoulli end-of-stroke NLL
    mix = jnp.sum(pi * gaussian, axis=1, keepdims=True)            # (tn, 1)
    loss_gaussian = -jnp.log(mix + EPS)
    # (no eps here, matching the torch reference: log(0) possible if eos saturates)
    loss_bernoulli = -jnp.log(eos * x_eos + (1.0 - eos) * (1.0 - x_eos))

    out_ref[...] = loss_gaussian + loss_bernoulli                   # (tn, 1)


def _round_up(x, m):
    return ((x + m - 1) // m) * m


def prediction_loss(output, target, batch_size, seq_len, *, tile_n=1024):
    """output = (eos, pi, mu1, mu2, sigma1, sigma2, rho) with shapes (N,1)/(N,M);
    target: (batch, seq, 3).  Returns scalar loss (sum / (batch_size*seq_len))."""
    eos, pi, mu1, mu2, sigma1, sigma2, rho = output
    N, M = pi.shape

    # glue: torch's target.view(-1, 3) — single (N, 3) stream, sliced in-kernel
    tgt = target.reshape(-1, 3)

    tn = min(tile_n, _round_up(N, 8))      # clamp for tiny inputs; keep 8-aligned
    grid = (pl.cdiv(N, tn),)               # last block may be partial (OOB rows dropped)

    spec_t = pl.BlockSpec((tn, 3), lambda i: (i, 0))
    spec_1 = pl.BlockSpec((tn, 1), lambda i: (i, 0))
    spec_m = pl.BlockSpec((tn, M), lambda i: (i, 0))

    cost = pl.CostEstimate(
        flops=int(N * M * 25 + N * 10),
        transcendentals=int(N * M * 4 + 2 * N),
        bytes_accessed=int(4 * (3 * N + N + 6 * N * M + N)),
    )

    per_row = pl.pallas_call(
        _loss_kernel,
        out_shape=jax.ShapeDtypeStruct((N, 1), jnp.float32),
        grid_spec=pltpu.PrefetchScalarGridSpec(
            num_scalar_prefetch=0,
            grid=grid,
            in_specs=[spec_t, spec_1,
                      spec_m, spec_m, spec_m, spec_m, spec_m, spec_m],
            out_specs=spec_1,
        ),
        compiler_params=pltpu.CompilerParams(
            dimension_semantics=("parallel",)),   # shards across TCs on v7x
        cost_estimate=cost,
    )(tgt, eos, pi, mu1, mu2, sigma1, sigma2, rho)

    # tiny final reduction + normalization in the wrapper
    return jnp.sum(per_row) / (batch_size * seq_len)


def _reference_loss(output, target, batch_size, seq_len):
    """Straight JAX port of the torch module (exact divides / sqrt)."""
    eos, pi, mu1, mu2, s1, s2, rho = output
    tgt = target.reshape(-1, 3)
    x1, x2, x_eos = tgt[:, 0:1], tgt[:, 1:2], tgt[:, 2:3]
    n1, n2 = x1 - mu1, x2 - mu2
    ss = s1 * s2
    z = (n1 / s1) ** 2 + (n2 / s2) ** 2 - 2.0 * rho * n1 * n2 / ss
    g = jnp.exp(-z / (2.0 * (1.0 - rho ** 2))) / (
        2.0 * math.pi * ss * jnp.sqrt(1.0 - rho ** 2))
    lg = -jnp.log(jnp.sum(pi * g, axis=1, keepdims=True) + EPS)
    lb = -jnp.log(eos * x_eos + (1.0 - eos) * (1.0 - x_eos))
    return jnp.sum(lg + lb) / (batch_size * seq_len)


def _make_inputs(key, batch_size, seq_len, M=20):
    keys = jax.random.split(key, 9)
    N = batch_size * seq_len
    eos = jax.nn.sigmoid(jax.random.normal(keys[0], (N, 1), jnp.float32))
    pi = jax.nn.softmax(jax.random.normal(keys[1], (N, M), jnp.float32), axis=1)
    mu1 = jax.random.normal(keys[2], (N, M), jnp.float32)
    mu2 = jax.random.normal(keys[3], (N, M), jnp.float32)
    s1 = jnp.exp(0.3 * jax.random.normal(keys[4], (N, M), jnp.float32))
    s2 = jnp.exp(0.3 * jax.random.normal(keys[5], (N, M), jnp.float32))
    rho = 0.9 * jnp.tanh(jax.random.normal(keys[6], (N, M), jnp.float32))
    txy = jax.random.normal(keys[7], (batch_size, seq_len, 2), jnp.float32)
    teos = (jax.random.uniform(keys[8], (batch_size, seq_len, 1)) > 0.7
            ).astype(jnp.float32)
    target = jnp.concatenate([txy, teos], axis=-1)     # (batch, seq, 3)
    return (eos, pi, mu1, mu2, s1, s2, rho), target


if __name__ == "__main__":
    key = jax.random.PRNGKey(0)

    # (batch, seq, tile_n): single tile, multi-tile exact, multi-tile w/ partial tail
    cases = [(2, 8, 1024), (4, 96, 128), (3, 50, 64)]

    for batch_size, seq_len, tile_n in cases:
        key, sub = jax.random.split(key)
        output, target = _make_inputs(sub, batch_size, seq_len, M=20)

        loss = prediction_loss(output, target, batch_size, seq_len, tile_n=tile_n)
        loss = jax.block_until_ready(loss)
        ref = _reference_loss(output, target, batch_size, seq_len)

        assert jnp.isfinite(loss), (batch_size, seq_len, loss)
        # tolerance accommodates the EUP approximate reciprocal used for 1/sigma
        assert jnp.allclose(loss, ref, rtol=2e-3, atol=2e-3), \
            (batch_size, seq_len, float(loss), float(ref))

    print("KERNEL_OK")
</pallas_src>

<mosaic_0001>
module attributes {stable_mosaic.version = 11 : i64} {
  func.func @_loss_kernel(%arg0: i32, %arg1: memref<16x3xf32, #tpu.memory_space<vmem>>, %arg2: memref<16x1xf32, #tpu.memory_space<vmem>>, %arg3: memref<16x20xf32, #tpu.memory_space<vmem>>, %arg4: memref<16x20xf32, #tpu.memory_space<vmem>>, %arg5: memref<16x20xf32, #tpu.memory_space<vmem>>, %arg6: memref<16x20xf32, #tpu.memory_space<vmem>>, %arg7: memref<16x20xf32, #tpu.memory_space<vmem>>, %arg8: memref<16x20xf32, #tpu.memory_space<vmem>>, %arg9: memref<16x1xf32, #tpu.memory_space<vmem>>) attributes {dimension_semantics = [#tpu.dimension_semantics<parallel>], iteration_bounds = array<i64: 1>, scalar_prefetch = 0 : i64, scratch_operands = 0 : i64, tpu.core_type = #tpu.core_type<tc>, window_params = [{transform_indices = @transform_0, window_bounds = array<i64: 16, 3>}, {transform_indices = @transform_1, window_bounds = array<i64: 16, 1>}, {transform_indices = @transform_2, window_bounds = array<i64: 16, 20>}, {transform_indices = @transform_3, window_bounds = array<i64: 16, 20>}, {transform_indices = @transform_4, window_bounds = array<i64: 16, 20>}, {transform_indices = @transform_5, window_bounds = array<i64: 16, 20>}, {transform_indices = @transform_6, window_bounds = array<i64: 16, 20>}, {transform_indices = @transform_7, window_bounds = array<i64: 16, 20>}, {transform_indices = @transform_8, window_bounds = array<i64: 16, 1>}]} {
    %c0 = arith.constant 0 : index
    %c0_0 = arith.constant 0 : index
    %0 = vector.load %arg1[%c0, %c0_0] : memref<16x3xf32, #tpu.memory_space<vmem>>, vector<16x3xf32>
    %1 = vector.extract_strided_slice %0 {offsets = [0, 0], sizes = [16, 1], strides = [1, 1]} : vector<16x3xf32> to vector<16x1xf32>
    %2 = vector.extract_strided_slice %0 {offsets = [0, 1], sizes = [16, 1], strides = [1, 1]} : vector<16x3xf32> to vector<16x1xf32>
    %3 = vector.extract_strided_slice %0 {offsets = [0, 2], sizes = [16, 1], strides = [1, 1]} : vector<16x3xf32> to vector<16x1xf32>
    %c0_1 = arith.constant 0 : index
    %c0_2 = arith.constant 0 : index
    %4 = vector.load %arg2[%c0_1, %c0_2] : memref<16x1xf32, #tpu.memory_space<vmem>>, vector<16x1xf32>
    %c0_3 = arith.constant 0 : index
    %c0_4 = arith.constant 0 : index
    %5 = vector.load %arg3[%c0_3, %c0_4] : memref<16x20xf32, #tpu.memory_space<vmem>>, vector<16x20xf32>
    %c0_5 = arith.constant 0 : index
    %c0_6 = arith.constant 0 : index
    %6 = vector.load %arg4[%c0_5, %c0_6] : memref<16x20xf32, #tpu.memory_space<vmem>>, vector<16x20xf32>
    %c0_7 = arith.constant 0 : index
    %c0_8 = arith.constant 0 : index
    %7 = vector.load %arg5[%c0_7, %c0_8] : memref<16x20xf32, #tpu.memory_space<vmem>>, vector<16x20xf32>
    %c0_9 = arith.constant 0 : index
    %c0_10 = arith.constant 0 : index
    %8 = vector.load %arg6[%c0_9, %c0_10] : memref<16x20xf32, #tpu.memory_space<vmem>>, vector<16x20xf32>
    %c0_11 = arith.constant 0 : index
    %c0_12 = arith.constant 0 : index
    %9 = vector.load %arg7[%c0_11, %c0_12] : memref<16x20xf32, #tpu.memory_space<vmem>>, vector<16x20xf32>
    %c0_13 = arith.constant 0 : index
    %c0_14 = arith.constant 0 : index
    %10 = vector.load %arg8[%c0_13, %c0_14] : memref<16x20xf32, #tpu.memory_space<vmem>>, vector<16x20xf32>
    %11 = tpu.reciprocal %8 {approx = true} : vector<16x20xf32> -> vector<16x20xf32>
    %12 = tpu.reciprocal %9 {approx = true} : vector<16x20xf32> -> vector<16x20xf32>
    %13 = vector.broadcast %1 : vector<16x1xf32> to vector<16x20xf32>
    %14 = arith.subf %13, %6 : vector<16x20xf32>
    %15 = arith.mulf %14, %11 : vector<16x20xf32>
    %16 = vector.broadcast %2 : vector<16x1xf32> to vector<16x20xf32>
    %17 = arith.subf %16, %7 : vector<16x20xf32>
    %18 = arith.mulf %17, %12 : vector<16x20xf32>
    %19 = arith.mulf %15, %15 : vector<16x20xf32>
    %20 = arith.mulf %18, %18 : vector<16x20xf32>
    %21 = arith.addf %19, %20 : vector<16x20xf32>
    %cst = arith.constant 2.000000e+00 : f32
    %22 = vector.broadcast %cst : f32 to vector<16x20xf32>
    %23 = arith.mulf %22, %10 : vector<16x20xf32>
    %24 = arith.mulf %23, %15 : vector<16x20xf32>
    %25 = arith.mulf %24, %18 : vector<16x20xf32>
    %26 = arith.subf %21, %25 : vector<16x20xf32>
    %27 = arith.mulf %10, %10 : vector<16x20xf32>
    %cst_15 = arith.constant 1.000000e+00 : f32
    %28 = vector.broadcast %cst_15 : f32 to vector<16x20xf32>
    %29 = arith.subf %28, %27 : vector<16x20xf32>
    %cst_16 = arith.constant -5.000000e-01 : f32
    %30 = vector.broadcast %cst_16 : f32 to vector<16x20xf32>
    %31 = arith.mulf %30, %26 : vector<16x20xf32>
    %32 = arith.divf %31, %29 : vector<16x20xf32>
    %33 = math.exp %32 : vector<16x20xf32>
    %cst_17 = arith.constant 0.159154937 : f32
    %34 = vector.broadcast %cst_17 : f32 to vector<16x20xf32>
    %35 = arith.mulf %34, %11 : vector<16x20xf32>
    %36 = arith.mulf %35, %12 : vector<16x20xf32>
    %37 = arith.mulf %33, %36 : vector<16x20xf32>
    %38 = math.rsqrt %29 : vector<16x20xf32>
    %39 = arith.mulf %37, %38 : vector<16x20xf32>
    %40 = arith.mulf %5, %39 : vector<16x20xf32>
    %cst_18 = arith.constant dense<0.000000e+00> : vector<16xf32>
    %41 = vector.multi_reduction <add>, %40, %cst_18 [1] : vector<16x20xf32> to vector<16xf32>
    %42 = vector.shape_cast %41 : vector<16xf32> to vector<16x1xf32>
    %cst_19 = arith.constant 1.1920929E-7 : f32
    %43 = vector.broadcast %cst_19 : f32 to vector<16x1xf32>
    %44 = arith.addf %42, %43 : vector<16x1xf32>
    %45 = math.log %44 : vector<16x1xf32>
    %cst_20 = arith.constant 0.000000e+00 : f32
    %46 = vector.broadcast %cst_20 : f32 to vector<16x1xf32>
    %47 = arith.subf %46, %45 : vector<16x1xf32>
    %48 = arith.mulf %4, %3 : vector<16x1xf32>
    %cst_21 = arith.constant 1.000000e+00 : f32
    %49 = vector.broadcast %cst_21 : f32 to vector<16x1xf32>
    %50 = arith.subf %49, %4 : vector<16x1xf32>
    %cst_22 = arith.constant 1.000000e+00 : f32
    %51 = vector.broadcast %cst_22 : f32 to vector<16x1xf32>
    %52 = arith.subf %51, %3 : vector<16x1xf32>
    %53 = arith.mulf %50, %52 : vector<16x1xf32>
    %54 = arith.addf %48, %53 : vector<16x1xf32>
    %55 = math.log %54 : vector<16x1xf32>
    %cst_23 = arith.constant 0.000000e+00 : f32
    %56 = vector.broadcast %cst_23 : f32 to vector<16x1xf32>
    %57 = arith.subf %56, %55 : vector<16x1xf32>
    %58 = arith.addf %47, %57 : vector<16x1xf32>
    %c0_24 = arith.constant 0 : index
    %c0_25 = arith.constant 0 : index
    %59 = vector.load %arg9[%c0_24, %c0_25] : memref<16x1xf32, #tpu.memory_space<vmem>>, vector<16x1xf32>
    tpu.vector_store %arg9[%c0_24, %c0_25], %58 {strides = array<i32>} : memref<16x1xf32, #tpu.memory_space<vmem>>, vector<16x1xf32>,
    return
  }
  func.func @transform_0(%arg0: i32) -> (i32, i32) {
    %c0_i32 = arith.constant 0 : i32
    %c0_i32_0 = arith.constant 0 : i32
    return %arg0, %c0_i32 : i32, i32
  }
  func.func @transform_1(%arg0: i32) -> (i32, i32) {
    %c0_i32 = arith.constant 0 : i32
    %c0_i32_0 = arith.constant 0 : i32
    return %arg0, %c0_i32 : i32, i32
  }
  func.func @transform_2(%arg0: i32) -> (i32, i32) {
    %c0_i32 = arith.constant 0 : i32
    %c0_i32_0 = arith.constant 0 : i32
    return %arg0, %c0_i32 : i32, i32
  }
  func.func @transform_3(%arg0: i32) -> (i32, i32) {
    %c0_i32 = arith.constant 0 : i32
    %c0_i32_0 = arith.constant 0 : i32
    return %arg0, %c0_i32 : i32, i32
  }
  func.func @transform_4(%arg0: i32) -> (i32, i32) {
    %c0_i32 = arith.constant 0 : i32
    %c0_i32_0 = arith.constant 0 : i32
    return %arg0, %c0_i32 : i32, i32
  }
  func.func @transform_5(%arg0: i32) -> (i32, i32) {
    %c0_i32 = arith.constant 0 : i32
    %c0_i32_0 = arith.constant 0 : i32
    return %arg0, %c0_i32 : i32, i32
  }
  func.func @transform_6(%arg0: i32) -> (i32, i32) {
    %c0_i32 = arith.constant 0 : i32
    %c0_i32_0 = arith.constant 0 : i32
    return %arg0, %c0_i32 : i32, i32
  }
  func.func @transform_7(%arg0: i32) -> (i32, i32) {
    %c0_i32 = arith.constant 0 : i32
    %c0_i32_0 = arith.constant 0 : i32
    return %arg0, %c0_i32 : i32, i32
  }
  func.func @transform_8(%arg0: i32) -> (i32, i32) {
    %c0_i32 = arith.constant 0 : i32
    %c0_i32_0 = arith.constant 0 : i32
    return %arg0, %c0_i32 : i32, i32
  }
}

</mosaic_0001>

<llo_original>
// kernel: tpu_custom_call.1
$region0: #{tpu_custom_call.1}
  #allocation0 [shape = 'u32[]', space=smem, size = 0x4, offset = 0x4, fixed_abs, tag = 'smem constant byte address 0x4 - core index']
  #allocation1 [shape = 'u32[144,128]{1,0:T(1,128)}', space=vmem, size = 0x12000, scoped, tag = 'internal scratch']
  %s0 = inlined_call_operand.vmem [shape: f32[16,3], index: 0, kind: input, shape index: {}]
  %s1 = inlined_call_operand.vmem [shape: f32[16,1], index: 1, kind: input, shape index: {}]
  %s2 = inlined_call_operand.vmem [shape: f32[16,20], index: 2, kind: input, shape index: {}]
  %s3 = inlined_call_operand.vmem [shape: f32[16,20], index: 3, kind: input, shape index: {}]
  %s4 = inlined_call_operand.vmem [shape: f32[16,20], index: 4, kind: input, shape index: {}]
  %s5 = inlined_call_operand.hbm [shape: f32[16,20], index: 5, kind: input, shape index: {}]
  %s6 = inlined_call_operand.hbm [shape: f32[16,20], index: 6, kind: input, shape index: {}]
  %s7 = inlined_call_operand.hbm [shape: f32[16,20], index: 7, kind: input, shape index: {}]
  %s8 = inlined_call_operand.vmem [shape: f32[16,1], index: 8, kind: output, shape index: {}]
  %s9 = sld [smem:[#allocation0]]
  $region54: #{tpu_custom_call.1} parent=0
    _
  %s11 = ssub.s32 1, %s9
  %s12 = scalar_select 0, %s11, %s9
  $region1: #{tpu_custom_call.1} parent=0
    #allocation2 [shape = 'u8[8192]{0}', space=vmem, size = 0x2000, scoped, tag = 'input window, operand 5, single buffered']
    #allocation3 [shape = 's32[1]{0}', space=sflag, size = 0x4, scoped, tag = 'scoped memory for tpu_custom_call.1']
    #allocation4 [shape = 'u8[8192]{0}', space=vmem, size = 0x2000, scoped, tag = 'input window, operand 6, single buffered']
    #allocation5 [shape = 's32[1]{0}', space=sflag, size = 0x4, scoped, tag = 'scoped memory for tpu_custom_call.1']
    #allocation6 [shape = 'u8[8192]{0}', space=vmem, size = 0x2000, scoped, tag = 'input window, operand 7, single buffered']
    %13 = vsyncpa [#allocation3], 0
    %14 = vsyncpa [#allocation5], 0
    // Predicated region
    $region2: #{tpu_custom_call.1} parent=1 // pred_check
      _
    $region3: #{tpu_custom_call.1} parent=1 // pred_check_branch
      %16 = sbr.rel (0) target = $region5
    $region4: #{tpu_custom_call.1} parent=1 // pred_region
      _
    $region5: #{tpu_custom_call.1} parent=1 // pred_fallthru
      _
    // Predicated region
    $region6: #{tpu_custom_call.1} parent=1 // pred_check
      _
    $region7: #{tpu_custom_call.1} parent=1 // pred_check_branch
      %18 = sbr.rel (0) target = $region9
    $region8: #{tpu_custom_call.1} parent=1 // pred_region
      _
    $region9: #{tpu_custom_call.1} parent=1 // pred_fallthru
      _
    // Predicated region
    $region10: #{tpu_custom_call.1} parent=1 // pred_check
      _
    $region11: #{tpu_custom_call.1} parent=1 // pred_check_branch
      %20 = sbr.rel (0) target = $region13
    $region12: #{tpu_custom_call.1} parent=1 // pred_region
      _
    $region13: #{tpu_custom_call.1} parent=1 // pred_fallthru
      _
    // Predicated region
    $region14: #{tpu_custom_call.1} parent=1 // pred_check
      _
    $region15: #{tpu_custom_call.1} parent=1 // pred_check_branch
      %22 = sbr.rel (0) target = $region17
    $region16: #{tpu_custom_call.1} parent=1 // pred_region
      _
    $region17: #{tpu_custom_call.1} parent=1 // pred_fallthru
      _
    // Predicated region
    $region18: #{tpu_custom_call.1} parent=1 // pred_check
      _
    $region19: #{tpu_custom_call.1} parent=1 // pred_check_branch
      %24 = sbr.rel (0) target = $region21
    $region20: #{tpu_custom_call.1} parent=1 // pred_region
      _
    $region21: #{tpu_custom_call.1} parent=1 // pred_fallthru
      _
    // Predicated region
    $region22: #{tpu_custom_call.1} parent=1 // pred_check
      _
    $region23: #{tpu_custom_call.1} parent=1 // pred_check_branch
      %26 = sbr.rel (0) target = $region25
    $region24: #{tpu_custom_call.1} parent=1 // pred_region
      %s28 = ssub.s32 256, 256
      %29 = vsyncadd [#allocation3], %s28
      %s30 = sshll.u32 [#allocation2], 4
      %s31 = int_to_ptr.vmem [resolvable:$true] %s30
      %36 = dma.hbm_to_vmem [thread:$0]  %s5, 256, %s31, [#allocation3], 128, 128, 8
    $region25: #{tpu_custom_call.1} parent=1 // pred_fallthru
      _
    // Predicated region
    $region26: #{tpu_custom_call.1} parent=1 // pred_check
      _
    $region27: #{tpu_custom_call.1} parent=1 // pred_check_branch
      %38 = sbr.rel (0) target = $region29
    $region28: #{tpu_custom_call.1} parent=1 // pred_region
      %s40 = ssub.s32 256, 256
      %41 = vsyncadd [#allocation5], %s40
      %s42 = sshll.u32 [#allocation4], 4
      %s43 = int_to_ptr.vmem [resolvable:$true] %s42
      %48 = dma.hbm_to_vmem [thread:$0]  %s6, 256, %s43, [#allocation5], 128, 128, 8
    $region29: #{tpu_custom_call.1} parent=1 // pred_fallthru
      _
    // Predicated region
    $region30: #{tpu_custom_call.1} parent=1 // pred_check
      _
    $region31: #{tpu_custom_call.1} parent=1 // pred_check_branch
      %50 = sbr.rel (0) target = $region33
    $region32: #{tpu_custom_call.1} parent=1 // pred_region
      %s52 = ssub.s32 256, 256
      %53 = vsyncadd [#allocation5], %s52
      %s54 = sshll.u32 [#allocation6], 4
      %s55 = int_to_ptr.vmem [resolvable:$true] %s54
      %60 = dma.hbm_to_vmem [thread:$0]  %s7, 256, %s55, [#allocation5], 128, 128, 8
    $region33: #{tpu_custom_call.1} parent=1 // pred_fallthru
      _
    // Predicated region
    $region34: #{tpu_custom_call.1} parent=1 // pred_check
      _
    $region35: #{tpu_custom_call.1} parent=1 // pred_check_branch
      %62 = sbr.rel (0) target = $region37
    $region36: #{tpu_custom_call.1} parent=1 // pred_region
      %63 = dma.done [#allocation3], 256
    $region37: #{tpu_custom_call.1} parent=1 // pred_fallthru
      _
    // Predicated region
    $region38: #{tpu_custom_call.1} parent=1 // pred_check
      _
    $region39: #{tpu_custom_call.1} parent=1 // pred_check_branch
      %65 = sbr.rel (0) target = $region41
    $region40: #{tpu_custom_call.1} parent=1 // pred_region
      %66 = dma.done [#allocation5], 256
    $region41: #{tpu_custom_call.1} parent=1 // pred_fallthru
      _
    // Predicated region
    $region42: #{tpu_custom_call.1} parent=1 // pred_check
      _
    $region43: #{tpu_custom_call.1} parent=1 // pred_check_branch
      %68 = sbr.rel (0) target = $region45
    $region44: #{tpu_custom_call.1} parent=1 // pred_region
      %69 = dma.done [#allocation5], 256
    $region45: #{tpu_custom_call.1} parent=1 // pred_fallthru
      _
    %v70 = vld [vmem:[%s0] sm:$0xff]
    %v71 = vld [vmem:[%s0 + $0x8] sm:$0xff]
    %v72 = vld [vmem:[%s1] sm:$0xff]
    %v73 = vld [vmem:[%s1 + $0x8] sm:$0xff]
    %v74 = vld [vmem:[%s2] sm:$0xff]
    %v75 = vld [vmem:[%s2 + $0x8] sm:$0xff]
    %v76 = vld [vmem:[%s3] sm:$0xff]
    %v77 = vld [vmem:[%s3 + $0x8] sm:$0xff]
    %v78 = vld [vmem:[%s4] sm:$0xff]
    %v79 = vld [vmem:[%s4 + $0x8] sm:$0xff]
    %v80 = vld [vmem:[#allocation2] sm:$0xff]
    %v81 = vld [vmem:[#allocation2 + $0x8] sm:$0xff]
    %v82 = vld [vmem:[#allocation4] sm:$0xff]
    %v83 = vld [vmem:[#allocation4 + $0x8] sm:$0xff]
    %v84 = vld [vmem:[#allocation6] sm:$0xff]
    %v85 = vld [vmem:[#allocation6 + $0x8] sm:$0xff]
    %v86 = vrcp.pop %v80
    %v87 = vrcp.pop %v81
    %v88 = vrcp.pop %v82
    %v89 = vrcp.pop %v83
    %91 = vset.pattern.permute.xlu0 0
    %92 = vperm.xlu0 %91, %v70
    %v93 = vpop.permute.xlu0 %92
    %96 = vset.pattern.permute.xlu0 0
    %97 = vperm.xlu0 %96, %v71
    %v98 = vpop.permute.xlu0 %97
    %v100 = vsub.f32 %v93, %v76
    %v101 = vsub.f32 %v98, %v77
    %v102 = vmul.f32 %v100, %v86
    %v103 = vmul.f32 %v101, %v87
    %104 = vset.pattern.permute.xlu0 1
    %105 = vperm.xlu0 %104, %v70
    %v106 = vpop.permute.xlu0 %105
    %108 = vset.pattern.permute.xlu0 1
    %109 = vperm.xlu0 %108, %v71
    %v110 = vpop.permute.xlu0 %109
    %v112 = vsub.f32 %v106, %v78
    %v113 = vsub.f32 %v110, %v79
    %v114 = vmul.f32 %v112, %v88
    %v115 = vmul.f32 %v113, %v89
    %v116 = vmul.f32 %v102, %v102
    %v117 = vmul.f32 %v103, %v103
    %v118 = vmul.f32 %v114, %v114
    %v119 = vmul.f32 %v115, %v115
    %v120 = vadd.f32 %v116, %v118
    %v121 = vadd.f32 %v117, %v119
    %v122 = vmul.f32 %v84, 2.0
    %v123 = vmul.f32 %v85, 2.0
    %v124 = vmul.f32 %v122, %v102
    %v125 = vmul.f32 %v123, %v103
    %v126 = vmul.f32 %v124, %v114
    %v127 = vmul.f32 %v125, %v115
    %v128 = vsub.f32 %v120, %v126
    %v129 = vsub.f32 %v121, %v127
    %v130 = vmul.f32 %v84, %v84
    %v131 = vmul.f32 %v85, %v85
    %v132 = vsub.f32 1.0, %v130
    %v133 = vsub.f32 1.0, %v131
    %v134 = vmul.f32 %v128, -0.5
    %v135 = vmul.f32 %v129, -0.5
    %v136 = vrcp.pop %v132
    %v137 = vmul.f32 %v134, %v136
    %v138 = vrcp.pop %v133
    %v139 = vmul.f32 %v135, %v138
    %v140 = vmul.f32 %v137, 1.442695
    %v141 = vpow.pop %v140
    %v142 = vmul.f32 %v139, 1.442695
    %v143 = vpow.pop %v142
    %v144 = vmul.f32 %v86, 0.15915494
    %v145 = vmul.f32 %v87, 0.15915494
    %v146 = vmul.f32 %v144, %v88
    %v147 = vmul.f32 %v145, %v89
    %v148 = vmul.f32 %v141, %v146
    %v149 = vmul.f32 %v143, %v147
    %v150 = vrsqrt.pop %v132
    %v151 = vrsqrt.pop %v133
    %v152 = vmul.f32 %v148, %v150
    %v153 = vmul.f32 %v149, %v151
    %v154 = vmul.f32 %v74, %v152
    %v155 = vmul.f32 %v75, %v153
    %vm156 = vcmask 162816
    %v157 = vsel %vm156, %v154, 0.0
    %158 = vadd.xlane.f32.xlu0 %v157
    %v159 = vpop.xlane.xlu0 %158
    %v160 = vsel %vm156, %v155, 0.0
    %161 = vadd.xlane.f32.xlu0 %v160
    %v162 = vpop.xlane.xlu0 %161
    %v163 = vadd.f32 %v159, 1.1920929e-07
    %v164 = vadd.f32 %v162, 1.1920929e-07
    %v165 = vlog2.pop %v163
    %v166 = vmul.f32 %v165, 0.6931472
    %v167 = vlog2.pop %v164
    %v168 = vmul.f32 %v167, 0.6931472
    %v169 = vsub.f32 0.0, %v166
    %v170 = vsub.f32 0.0, %v168
    %171 = vrot.lane.b32.xlu0 %v70, 126
    %v172 = vpop.permute.xlu0 %171
    %173 = vrot.lane.b32.xlu0 %v71, 126
    %v174 = vpop.permute.xlu0 %173
    %v177 = vmul.f32 %v72, %v172
    %v178 = vmul.f32 %v73, %v174
    %v179 = vsub.f32 1.0, %v72
    %v180 = vsub.f32 1.0, %v73
    %v181 = vsub.f32 1.0, %v70
    %v182 = vsub.f32 1.0, %v71
    %185 = vrot.lane.b32.xlu0 %v181, 126
    %v186 = vpop.permute.xlu0 %185
    %187 = vrot.lane.b32.xlu0 %v182, 126
    %v188 = vpop.permute.xlu0 %187
    %v191 = vmul.f32 %v179, %v186
    %v192 = vmul.f32 %v180, %v188
    %v193 = vadd.f32 %v177, %v191
    %v194 = vadd.f32 %v178, %v192
    %v195 = vlog2.pop %v193
    %v196 = vmul.f32 %v195, 0.6931472
    %v197 = vlog2.pop %v194
    %v198 = vmul.f32 %v197, 0.6931472
    %v199 = vsub.f32 0.0, %v196
    %v200 = vsub.f32 0.0, %v198
    %v201 = vadd.f32 %v169, %v199
    %v202 = vadd.f32 %v170, %v200
    %vm203 = vcmask 7168
    %204 = vst.msk [vmem:[%s8] sm:$0xff] %vm203, %v201
    %205 = vst.msk [vmem:[%s8 + $0x8] sm:$0xff] %vm203, %v202
    // Predicated region
    $region46: #{tpu_custom_call.1} parent=1 // pred_check
      _
    $region47: #{tpu_custom_call.1} parent=1 // pred_check_branch
      %207 = sbr.rel (0) target = $region49
    $region48: #{tpu_custom_call.1} parent=1 // pred_region
      _
    $region49: #{tpu_custom_call.1} parent=1 // pred_fallthru
      _
    // Predicated region
    $region50: #{tpu_custom_call.1} parent=1 // pred_check
      _
    $region51: #{tpu_custom_call.1} parent=1 // pred_check_branch
      %209 = sbr.rel (0) target = $region53
    $region52: #{tpu_custom_call.1} parent=1 // pred_region
      _
    $region53: #{tpu_custom_call.1} parent=1 // pred_fallthru
      _
    %210 = vsyncpa [#allocation3], 1
    %211 = vsyncpa [#allocation5], 1

</llo_original>
